<compile_context>
chip_gen: v6e
topology: v6e:2x2x1
jax: 0.10.0
libtpu: 0.0.40
codegen_flags: <defaults>
</compile_context>

<pallas_src>
import jax
import jax.numpy as jnp
from jax.experimental import pallas as pl
from jax.experimental.pallas import tpu as pltpu

ALPHA = 0.2          # LeakyReLU negative slope
NEG_BIG = -9e15      # mask value used by the PyTorch module


def gat_kernel(bias_ref, wh_ref, awh1_ref, awh2_ref, out_ref):
    # Attention logits for this TQ-row block: e = leaky_relu(aWh1 + aWh2^T).
    # aWh1 arrives as a [TQ, 1] column block, aWh2 as a resident [1, N] row,
    # so the per-block cost is a broadcast-add (no MXU matvec, no transpose).
    e = awh1_ref[...] + awh2_ref[...]                     # [TQ, N] f32
    e = jnp.maximum(e, ALPHA * e)                         # LeakyReLU (mul+max)

    # Additive mask bias: 0 on edges, -9e15 off-edges.  f32 add absorbs e on
    # masked entries, so edgeless rows keep PyTorch's uniform-softmax behavior.
    att = e + bias_ref[...]                               # bf16 bias -> f32 promote
    m = jnp.max(att, axis=1, keepdims=True)
    p = jnp.exp(att - m)                                  # EUP, unnormalized
    inv = pl.reciprocal(jnp.sum(p, axis=1, keepdims=True), approx=True)  # [TQ,1]

    # Aggregate with the UNNORMALIZED attention (bf16 x bf16 -> f32 on the
    # MXU), then normalize the small [TQ, HP] result instead of the [TQ, N]
    # attention block.  Output block is lane-dense (unmasked vst stores).
    acc = jnp.dot(p.astype(jnp.bfloat16), wh_ref[...],
                  preferred_element_type=jnp.float32)     # [TQ, HP] f32
    out_ref[...] = acc * inv


def _vmem_capacity_bytes():
    try:
        return int(pltpu.get_tpu_info().vmem_capacity_bytes)
    except Exception:
        return 64 * 1024 * 1024                           # conservative (v7x per-TC)


def _per_block_bytes(n, hp):
    # resident (double-buffered by default): Wh [N,HP] bf16 + aWh2 [1,N] f32
    resident = 2 * n * hp * 2 + 2 * n * 4
    # per block-row: bias (bf16, 2-deep) + out (f32, 2-deep) + aWh1 (f32, 2-deep)
    # + ~3 live f32 [tq, N] temporaries (att / p / intermediates)
    per_row = 2 * n * 2 + 2 * hp * 4 + 2 * 4 + 3 * n * 4
    return resident, per_row


def choose_tq(n, hid_c, budget_bytes=None):
    """Largest sublane-aligned row-block that fits the per-core VMEM budget."""
    if n < 8:
        return n
    hp = ((hid_c + 127) // 128) * 128
    if budget_bytes is None:
        budget_bytes = int(0.75 * _vmem_capacity_bytes())
    resident, per_row = _per_block_bytes(n, hp)
    avail = max(budget_bytes - resident, per_row * 8)
    tq = (avail // per_row) // 8 * 8
    tq = int(max(8, min(tq, 512)))                        # 256+ fills the 256-row MXU
    return min(tq, ((n + 7) // 8) * 8)


def gat_prepare_adj(adj, tq):
    """Per-graph static structure: additive mask bias, row-padded to the grid.

    Compute ONCE per graph and reuse across forward calls -- keeps the O(N^2)
    convert/pad off the per-call HBM path.  Compare is done in f32 so weighted
    graphs with tiny positive edge weights are masked correctly.
    """
    n = adj.shape[0]
    npad = pl.cdiv(n, tq) * tq
    bias = jnp.where(adj > 0, 0.0, NEG_BIG).astype(jnp.bfloat16)   # [N, N]
    if npad != n:
        # padded rows: bias 0 everywhere -> finite logits -> rows sliced off later
        bias = jnp.pad(bias, ((0, npad - n), (0, 0)))
    return bias


def gat_forward(h, adj_bias, w_t, b, a1, a2, *, tq):
    """h: [N, in_c] f32, adj_bias: [NP, N] bf16 (from gat_prepare_adj),
    w_t: [in_c, hid_c], b: [1, hid_c], a1/a2: [hid_c, 1]."""
    npad, n = adj_bias.shape
    hid_c = w_t.shape[1]
    hp = ((hid_c + 127) // 128) * 128                     # lane-dense padded features

    # Hoisted tiny projections (plain XLA): Wh and fused attention mat-vecs.
    wh = h @ w_t + b                                      # [N, hid_c] f32
    awh = wh @ jnp.concatenate([a1, a2], axis=1)          # [N, 2] f32

    awh1 = jnp.zeros((npad, 1), jnp.float32).at[:n, :].set(awh[:, 0:1])
    awh2_row = awh[:, 1:2].T                              # [1, N] lane-major row
    wh_pad = jnp.zeros((n, hp), jnp.bfloat16).at[:, :hid_c].set(wh.astype(jnp.bfloat16))

    cap = _vmem_capacity_bytes()
    resident, per_row = _per_block_bytes(n, hp)
    need = resident + tq * per_row
    vmem_limit = int(min(max(int(1.25 * need), 32 * 1024 * 1024), cap))

    grid = (npad // tq,)
    out_pad = pl.pallas_call(
        gat_kernel,
        out_shape=jax.ShapeDtypeStruct((npad, hp), jnp.float32),
        grid=grid,
        in_specs=[
            pl.BlockSpec((tq, n), lambda i: (i, 0)),      # additive mask bias block (bf16)
            pl.BlockSpec((n, hp), lambda i: (0, 0)),      # Wh, fully resident (bf16)
            pl.BlockSpec((tq, 1), lambda i: (i, 0)),      # aWh1 column block (f32)
            pl.BlockSpec((1, n), lambda i: (0, 0)),       # aWh2 row, resident (f32)
        ],
        out_specs=pl.BlockSpec((tq, hp), lambda i: (i, 0)),
        compiler_params=pltpu.CompilerParams(
            dimension_semantics=("parallel",),            # shard row blocks across TCs (v7x)
            vmem_limit_bytes=vmem_limit,
        ),
    )(adj_bias, wh_pad, awh1, awh2_row)

    return out_pad[:n, :hid_c]


def gat_reference(h, adj, w_t, b, a1, a2):
    wh = h @ w_t + b
    e = wh @ a1 + (wh @ a2).T
    e = jnp.where(e > 0, e, ALPHA * e)
    att = jnp.where(adj > 0, e, jnp.full_like(e, NEG_BIG))
    att = jax.nn.softmax(att, axis=1)
    return att @ wh


if __name__ == "__main__":
    N, in_c, hid_c = 256, 8, 32
    key = jax.random.PRNGKey(0)
    k_h, k_adj, k_w, k_b, k_a = jax.random.split(key, 5)

    # inputs
    h = jax.random.normal(k_h, (N, in_c), dtype=jnp.float32)
    adj = (jax.random.uniform(k_adj, (N, N)) > 0.6).astype(jnp.float32)
    adj = jnp.maximum(adj, jnp.eye(N, dtype=jnp.float32))  # self-loops so rows are non-empty

    # deterministic parameter init (shapes from the module's __init__)
    # nn.Linear(in_c, hid_c): weight [hid_c, in_c] (kept transposed), bias [hid_c]
    lin_bound = 1.0 / jnp.sqrt(in_c)
    w_t = jax.random.uniform(k_w, (in_c, hid_c), minval=-lin_bound, maxval=lin_bound,
                             dtype=jnp.float32)
    b = jax.random.uniform(k_b, (1, hid_c), minval=-lin_bound, maxval=lin_bound,
                           dtype=jnp.float32)
    # a: [2*hid_c, 1], xavier_uniform with leaky_relu gain
    gain = jnp.sqrt(2.0 / (1.0 + ALPHA ** 2))
    a_bound = gain * jnp.sqrt(6.0 / (2 * hid_c + 1))
    a = jax.random.uniform(k_a, (2 * hid_c, 1), minval=-a_bound, maxval=a_bound,
                           dtype=jnp.float32)
    a1, a2 = a[:hid_c], a[hid_c:]

    # per-graph prep (amortized over many forward calls in real use)
    tq = choose_tq(N, hid_c)
    adj_bias = gat_prepare_adj(adj, tq)

    fwd = jax.jit(gat_forward, static_argnames=("tq",))
    out = fwd(h, adj_bias, w_t, b, a1, a2, tq=tq)
    jax.block_until_ready(out)

    ref = gat_reference(h, adj, w_t, b, a1, a2)
    assert out.shape == (N, hid_c)
    # bf16 aggregation operands + EUP approx reciprocal => relaxed tolerance vs f32 reference
    assert jnp.allclose(out, ref, atol=5e-2, rtol=5e-2), "mismatch vs JAX reference"

    print("KERNEL_OK")
</pallas_src>

<mosaic_0001>
module attributes {stable_mosaic.version = 11 : i64} {
  func.func @gat_kernel(%arg0: i32, %arg1: memref<256x256xbf16, #tpu.memory_space<vmem>>, %arg2: memref<256x128xbf16, #tpu.memory_space<vmem>>, %arg3: memref<256x1xf32, #tpu.memory_space<vmem>>, %arg4: memref<1x256xf32, #tpu.memory_space<vmem>>, %arg5: memref<256x128xf32, #tpu.memory_space<vmem>>) attributes {dimension_semantics = [#tpu.dimension_semantics<parallel>], iteration_bounds = array<i64: 1>, scalar_prefetch = 0 : i64, scratch_operands = 0 : i64, tpu.core_type = #tpu.core_type<tc>, window_params = [{transform_indices = @transform_0, window_bounds = array<i64: 256, 256>}, {pipeline_mode = #tpu.pipeline_mode<synchronous>, transform_indices = @transform_1, window_bounds = array<i64: 256, 128>}, {transform_indices = @transform_2, window_bounds = array<i64: 256, 1>}, {pipeline_mode = #tpu.pipeline_mode<synchronous>, transform_indices = @transform_3, window_bounds = array<i64: 1, 256>}, {transform_indices = @transform_4, window_bounds = array<i64: 256, 128>}]} {
    %c0 = arith.constant 0 : index
    %c0_0 = arith.constant 0 : index
    %0 = vector.load %arg3[%c0, %c0_0] : memref<256x1xf32, #tpu.memory_space<vmem>>, vector<256x1xf32>
    %c0_1 = arith.constant 0 : index
    %c0_2 = arith.constant 0 : index
    %1 = vector.load %arg4[%c0_1, %c0_2] : memref<1x256xf32, #tpu.memory_space<vmem>>, vector<1x256xf32>
    %2 = vector.broadcast %0 : vector<256x1xf32> to vector<256x256xf32>
    %3 = vector.broadcast %1 : vector<1x256xf32> to vector<256x256xf32>
    %4 = arith.addf %2, %3 : vector<256x256xf32>
    %cst = arith.constant 2.000000e-01 : f32
    %5 = vector.broadcast %cst : f32 to vector<256x256xf32>
    %6 = arith.mulf %5, %4 : vector<256x256xf32>
    %7 = arith.maximumf %4, %6 : vector<256x256xf32>
    %c0_3 = arith.constant 0 : index
    %c0_4 = arith.constant 0 : index
    %8 = vector.load %arg1[%c0_3, %c0_4] : memref<256x256xbf16, #tpu.memory_space<vmem>>, vector<256x256xbf16>
    %9 = arith.extf %8 : vector<256x256xbf16> to vector<256x256xf32>
    %10 = arith.addf %7, %9 : vector<256x256xf32>
    %cst_5 = arith.constant dense<0xFF800000> : vector<256xf32>
    %11 = vector.multi_reduction <maximumf>, %10, %cst_5 [1] : vector<256x256xf32> to vector<256xf32>
    %12 = vector.shape_cast %11 : vector<256xf32> to vector<256x1xf32>
    %13 = vector.broadcast %12 : vector<256x1xf32> to vector<256x256xf32>
    %14 = arith.subf %10, %13 : vector<256x256xf32>
    %15 = math.exp %14 : vector<256x256xf32>
    %cst_6 = arith.constant dense<0.000000e+00> : vector<256xf32>
    %16 = vector.multi_reduction <add>, %15, %cst_6 [1] : vector<256x256xf32> to vector<256xf32>
    %17 = vector.shape_cast %16 : vector<256xf32> to vector<256x1xf32>
    %18 = tpu.reciprocal %17 {approx = true} : vector<256x1xf32> -> vector<256x1xf32>
    %19 = arith.truncf %15 : vector<256x256xf32> to vector<256x256xbf16>
    %c0_7 = arith.constant 0 : index
    %c0_8 = arith.constant 0 : index
    %20 = vector.load %arg2[%c0_7, %c0_8] : memref<256x128xbf16, #tpu.memory_space<vmem>>, vector<256x128xbf16>
    %cst_9 = arith.constant dense<0.000000e+00> : vector<256x128xf32>
    %21 = tpu.matmul %19, %20, %cst_9 {dimension_numbers = #tpu.dot_dimension_numbers<[1], [0], [0], [1], [0, 0, 1, 1], [], []>} : vector<256x256xbf16>, vector<256x128xbf16>, vector<256x128xf32> -> vector<256x128xf32>
    %22 = vector.broadcast %18 : vector<256x1xf32> to vector<256x128xf32>
    %23 = arith.mulf %21, %22 : vector<256x128xf32>
    %c0_10 = arith.constant 0 : index
    %c0_11 = arith.constant 0 : index
    %24 = vector.load %arg5[%c0_10, %c0_11] : memref<256x128xf32, #tpu.memory_space<vmem>>, vector<256x128xf32>
    tpu.vector_store %arg5[%c0_10, %c0_11], %23 {strides = array<i32>} : memref<256x128xf32, #tpu.memory_space<vmem>>, vector<256x128xf32>,
    return
  }
  func.func @transform_0(%arg0: i32) -> (i32, i32) {
    %c0_i32 = arith.constant 0 : i32
    %c0_i32_0 = arith.constant 0 : i32
    return %arg0, %c0_i32 : i32, i32
  }
  func.func @transform_1(%arg0: i32) -> (i32, i32) {
    %c0_i32 = arith.constant 0 : i32
    %c0_i32_0 = arith.constant 0 : i32
    %c0_i32_1 = arith.constant 0 : i32
    return %c0_i32, %c0_i32_0 : i32, i32
  }
  func.func @transform_2(%arg0: i32) -> (i32, i32) {
    %c0_i32 = arith.constant 0 : i32
    %c0_i32_0 = arith.constant 0 : i32
    return %arg0, %c0_i32 : i32, i32
  }
  func.func @transform_3(%arg0: i32) -> (i32, i32) {
    %c0_i32 = arith.constant 0 : i32
    %c0_i32_0 = arith.constant 0 : i32
    %c0_i32_1 = arith.constant 0 : i32
    return %c0_i32, %c0_i32_0 : i32, i32
  }
  func.func @transform_4(%arg0: i32) -> (i32, i32) {
    %c0_i32 = arith.constant 0 : i32
    %c0_i32_0 = arith.constant 0 : i32
    return %arg0, %c0_i32 : i32, i32
  }
}

</mosaic_0001>

<llo_original>
// kernel: gat_forward.1
$region0: #{gat_forward.1}
  #allocation0 [shape = 'u32[]', space=smem, size = 0x4, offset = 0x4, fixed_abs, tag = 'smem constant byte address 0x4 - core index']
  #allocation1 [shape = 'u32[144,128]{1,0:T(1,128)}', space=vmem, size = 0x12000, scoped, tag = 'internal scratch']
  %s0 = inlined_call_operand.vmem [shape: bf16[256,256], index: 0, kind: input, shape index: {}]
  %s1 = inlined_call_operand.vmem [shape: bf16[256,128], index: 1, kind: input, shape index: {}]
  %s2 = inlined_call_operand.vmem [shape: f32[256,1], index: 2, kind: input, shape index: {}]
  %s3 = inlined_call_operand.vmem [shape: f32[1,256], index: 3, kind: input, shape index: {}]
  %s4 = inlined_call_operand.vmem [shape: f32[256,128], index: 4, kind: output, shape index: {}]
  %s5 = sld [smem:[#allocation0]]
  $region26: #{gat_forward.1} parent=0
    _
  %s7 = ssub.s32 1, %s5
  %s8 = scalar_select 0, %s7, %s5
  // Predicated region
  $region2: #{gat_forward.1} parent=0 // pred_check
    _
  $region3: #{gat_forward.1} parent=0 // pred_check_branch
    %10 = sbr.rel (0) target = $region5
  $region4: #{gat_forward.1} parent=0 // pred_region
    _
  $region5: #{gat_forward.1} parent=0 // pred_fallthru
    _
  // Predicated region
  $region6: #{gat_forward.1} parent=0 // pred_check
    _
  $region7: #{gat_forward.1} parent=0 // pred_check_branch
    %12 = sbr.rel (0) target = $region9
  $region8: #{gat_forward.1} parent=0 // pred_region
    _
  $region9: #{gat_forward.1} parent=0 // pred_fallthru
    _
  // Predicated region
  $region10: #{gat_forward.1} parent=0 // pred_check
    _
  $region11: #{gat_forward.1} parent=0 // pred_check_branch
    %14 = sbr.rel (0) target = $region13
  $region12: #{gat_forward.1} parent=0 // pred_region
    _
  $region13: #{gat_forward.1} parent=0 // pred_fallthru
    _
  // Predicated region
  $region14: #{gat_forward.1} parent=0 // pred_check
    _
  $region15: #{gat_forward.1} parent=0 // pred_check_branch
    %16 = sbr.rel (0) target = $region17
  $region16: #{gat_forward.1} parent=0 // pred_region
    _
  $region17: #{gat_forward.1} parent=0 // pred_fallthru
    _
  %v18 = vld [vmem:[%s2] sm:$0xff]
  %v19 = vld [vmem:[%s2 + $0x8] sm:$0xff]
  %v20 = vld [vmem:[%s2 + $0x10] sm:$0xff]
  %v21 = vld [vmem:[%s2 + $0x18] sm:$0xff]
  %v22 = vld [vmem:[%s2 + $0x20] sm:$0xff]
  %v23 = vld [vmem:[%s2 + $0x28] sm:$0xff]
  %v24 = vld [vmem:[%s2 + $0x30] sm:$0xff]
  %v25 = vld [vmem:[%s2 + $0x38] sm:$0xff]
  %v26 = vld [vmem:[%s2 + $0x40] sm:$0xff]
  %v27 = vld [vmem:[%s2 + $0x48] sm:$0xff]
  %v28 = vld [vmem:[%s2 + $0x50] sm:$0xff]
  %v29 = vld [vmem:[%s2 + $0x58] sm:$0xff]
  %v30 = vld [vmem:[%s2 + $0x60] sm:$0xff]
  %v31 = vld [vmem:[%s2 + $0x68] sm:$0xff]
  %v32 = vld [vmem:[%s2 + $0x70] sm:$0xff]
  %v33 = vld [vmem:[%s2 + $0x78] sm:$0xff]
  %v34 = vld [vmem:[%s2 + $0x80] sm:$0xff]
  %v35 = vld [vmem:[%s2 + $0x88] sm:$0xff]
  %v36 = vld [vmem:[%s2 + $0x90] sm:$0xff]
  %v37 = vld [vmem:[%s2 + $0x98] sm:$0xff]
  %v38 = vld [vmem:[%s2 + $0xa0] sm:$0xff]
  %v39 = vld [vmem:[%s2 + $0xa8] sm:$0xff]
  %v40 = vld [vmem:[%s2 + $0xb0] sm:$0xff]
  %v41 = vld [vmem:[%s2 + $0xb8] sm:$0xff]
  %v42 = vld [vmem:[%s2 + $0xc0] sm:$0xff]
  %v43 = vld [vmem:[%s2 + $0xc8] sm:$0xff]
  %v44 = vld [vmem:[%s2 + $0xd0] sm:$0xff]
  %v45 = vld [vmem:[%s2 + $0xd8] sm:$0xff]
  %v46 = vld [vmem:[%s2 + $0xe0] sm:$0xff]
  %v47 = vld [vmem:[%s2 + $0xe8] sm:$0xff]
  %v48 = vld [vmem:[%s2 + $0xf0] sm:$0xff]
  %v49 = vld [vmem:[%s2 + $0xf8] sm:$0xff]
  %v50 = vld [vmem:[%s3] sm:$0x3]
  %52 = vset.pattern.permute.xlu0 0
  %53 = vperm.xlu0 %52, %v18
  %v54 = vpop.permute.xlu0 %53
  %57 = vset.pattern.permute.xlu0 0
  %58 = vperm.xlu0 %57, %v19
  %v59 = vpop.permute.xlu0 %58
  %62 = vset.pattern.permute.xlu0 0
  %63 = vperm.xlu0 %62, %v20
  %v64 = vpop.permute.xlu0 %63
  %67 = vset.pattern.permute.xlu0 0
  %68 = vperm.xlu0 %67, %v21
  %v69 = vpop.permute.xlu0 %68
  %72 = vset.pattern.permute.xlu0 0
  %73 = vperm.xlu0 %72, %v22
  %v74 = vpop.permute.xlu0 %73
  %77 = vset.pattern.permute.xlu0 0
  %78 = vperm.xlu0 %77, %v23
  %v79 = vpop.permute.xlu0 %78
  %82 = vset.pattern.permute.xlu0 0
  %83 = vperm.xlu0 %82, %v24
  %v84 = vpop.permute.xlu0 %83
  %87 = vset.pattern.permute.xlu0 0
  %88 = vperm.xlu0 %87, %v25
  %v89 = vpop.permute.xlu0 %88
  %92 = vset.pattern.permute.xlu0 0
  %93 = vperm.xlu0 %92, %v26
  %v94 = vpop.permute.xlu0 %93
  %97 = vset.pattern.permute.xlu0 0
  %98 = vperm.xlu0 %97, %v27
  %v99 = vpop.permute.xlu0 %98
  %102 = vset.pattern.permute.xlu0 0
  %103 = vperm.xlu0 %102, %v28
  %v104 = vpop.permute.xlu0 %103
  %107 = vset.pattern.permute.xlu0 0
  %108 = vperm.xlu0 %107, %v29
  %v109 = vpop.permute.xlu0 %108
  %112 = vset.pattern.permute.xlu0 0
  %113 = vperm.xlu0 %112, %v30
  %v114 = vpop.permute.xlu0 %113
  %117 = vset.pattern.permute.xlu0 0
  %118 = vperm.xlu0 %117, %v31
  %v119 = vpop.permute.xlu0 %118
  %122 = vset.pattern.permute.xlu0 0
  %123 = vperm.xlu0 %122, %v32
  %v124 = vpop.permute.xlu0 %123
  %127 = vset.pattern.permute.xlu0 0
  %128 = vperm.xlu0 %127, %v33
  %v129 = vpop.permute.xlu0 %128
  %132 = vset.pattern.permute.xlu0 0
  %133 = vperm.xlu0 %132, %v34
  %v134 = vpop.permute.xlu0 %133
  %137 = vset.pattern.permute.xlu0 0
  %138 = vperm.xlu0 %137, %v35
  %v139 = vpop.permute.xlu0 %138
  %142 = vset.pattern.permute.xlu0 0
  %143 = vperm.xlu0 %142, %v36
  %v144 = vpop.permute.xlu0 %143
  %147 = vset.pattern.permute.xlu0 0
  %148 = vperm.xlu0 %147, %v37
  %v149 = vpop.permute.xlu0 %148
  %152 = vset.pattern.permute.xlu0 0
  %153 = vperm.xlu0 %152, %v38
  %v154 = vpop.permute.xlu0 %153
  %157 = vset.pattern.permute.xlu0 0
  %158 = vperm.xlu0 %157, %v39
  %v159 = vpop.permute.xlu0 %158
  %162 = vset.pattern.permute.xlu0 0
  %163 = vperm.xlu0 %162, %v40
  %v164 = vpop.permute.xlu0 %163
  %167 = vset.pattern.permute.xlu0 0
  %168 = vperm.xlu0 %167, %v41
  %v169 = vpop.permute.xlu0 %168
  %172 = vset.pattern.permute.xlu0 0
  %173 = vperm.xlu0 %172, %v42
  %v174 = vpop.permute.xlu0 %173
  %177 = vset.pattern.permute.xlu0 0
  %178 = vperm.xlu0 %177, %v43
  %v179 = vpop.permute.xlu0 %178
  %182 = vset.pattern.permute.xlu0 0
  %183 = vperm.xlu0 %182, %v44
  %v184 = vpop.permute.xlu0 %183
  %187 = vset.pattern.permute.xlu0 0
  %188 = vperm.xlu0 %187, %v45
  %v189 = vpop.permute.xlu0 %188
  %192 = vset.pattern.permute.xlu0 0
  %193 = vperm.xlu0 %192, %v46
  %v194 = vpop.permute.xlu0 %193
  %197 = vset.pattern.permute.xlu0 0
  %198 = vperm.xlu0 %197, %v47
  %v199 = vpop.permute.xlu0 %198
  %202 = vset.pattern.permute.xlu0 0
  %203 = vperm.xlu0 %202, %v48
  %v204 = vpop.permute.xlu0 %203
  %207 = vset.pattern.permute.xlu0 0
  %208 = vperm.xlu0 %207, %v49
  %v209 = vpop.permute.xlu0 %208
  %v212 = vlaneseq
  %v213 = vshrl.u32 %v212, 7
  %v214 = vsub.s32 0, %v213
  %v215 = vrot.slane %v50, %v214
  %v216 = vlaneseq
  %v217 = vshrl.u32 %v216, 7
  %v218 = vsub.s32 1, %v217
  %v219 = vrot.slane %v50, %v218
  %v222 = vadd.f32 %v54, %v215
  %v223 = vadd.f32 %v54, %v219
  %v224 = vadd.f32 %v59, %v215
  %v225 = vadd.f32 %v59, %v219
  %v226 = vadd.f32 %v64, %v215
  %v227 = vadd.f32 %v64, %v219
  %v228 = vadd.f32 %v69, %v215
  %v229 = vadd.f32 %v69, %v219
  %v230 = vadd.f32 %v74, %v215
  %v231 = vadd.f32 %v74, %v219
  %v232 = vadd.f32 %v79, %v215
  %v233 = vadd.f32 %v79, %v219
  %v234 = vadd.f32 %v84, %v215
  %v235 = vadd.f32 %v84, %v219
  %v236 = vadd.f32 %v89, %v215
  %v237 = vadd.f32 %v89, %v219
  %v238 = vadd.f32 %v94, %v215
  %v239 = vadd.f32 %v94, %v219
  %v240 = vadd.f32 %v99, %v215
  %v241 = vadd.f32 %v99, %v219
  %v242 = vadd.f32 %v104, %v215
  %v243 = vadd.f32 %v104, %v219
  %v244 = vadd.f32 %v109, %v215
  %v245 = vadd.f32 %v109, %v219
  %v246 = vadd.f32 %v114, %v215
  %v247 = vadd.f32 %v114, %v219
  %v248 = vadd.f32 %v119, %v215
  %v249 = vadd.f32 %v119, %v219
  %v250 = vadd.f32 %v124, %v215
  %v251 = vadd.f32 %v124, %v219
  %v252 = vadd.f32 %v129, %v215
  %v253 = vadd.f32 %v129, %v219
  %v254 = vadd.f32 %v134, %v215
  %v255 = vadd.f32 %v134, %v219
  %v256 = vadd.f32 %v139, %v215
  %v257 = vadd.f32 %v139, %v219
  %v258 = vadd.f32 %v144, %v215
  %v259 = vadd.f32 %v144, %v219
  %v260 = vadd.f32 %v149, %v215
  %v261 = vadd.f32 %v149, %v219
  %v262 = vadd.f32 %v154, %v215
  %v263 = vadd.f32 %v154, %v219
  %v264 = vadd.f32 %v159, %v215
  %v265 = vadd.f32 %v159, %v219
  %v266 = vadd.f32 %v164, %v215
  %v267 = vadd.f32 %v164, %v219
  %v268 = vadd.f32 %v169, %v215
  %v269 = vadd.f32 %v169, %v219
  %v270 = vadd.f32 %v174, %v215
  %v271 = vadd.f32 %v174, %v219
  %v272 = vadd.f32 %v179, %v215
  %v273 = vadd.f32 %v179, %v219
  %v274 = vadd.f32 %v184, %v215
  %v275 = vadd.f32 %v184, %v219
  %v276 = vadd.f32 %v189, %v215
  %v277 = vadd.f32 %v189, %v219
  %v278 = vadd.f32 %v194, %v215
  %v279 = vadd.f32 %v194, %v219
  %v280 = vadd.f32 %v199, %v215
  %v281 = vadd.f32 %v199, %v219
  %v282 = vadd.f32 %v204, %v215
  %v283 = vadd.f32 %v204, %v219
  %v284 = vadd.f32 %v209, %v215
  %v285 = vadd.f32 %v209, %v219
  %v286 = vmul.f32 %v222, 0.2
  %v287 = vmul.f32 %v223, 0.2
  %v288 = vmul.f32 %v224, 0.2
  %v289 = vmul.f32 %v225, 0.2
  %v290 = vmul.f32 %v226, 0.2
  %v291 = vmul.f32 %v227, 0.2
  %v292 = vmul.f32 %v228, 0.2
  %v293 = vmul.f32 %v229, 0.2
  %v294 = vmul.f32 %v230, 0.2
  %v295 = vmul.f32 %v231, 0.2
  %v296 = vmul.f32 %v232, 0.2
  %v297 = vmul.f32 %v233, 0.2
  %v298 = vmul.f32 %v234, 0.2
  %v299 = vmul.f32 %v235, 0.2
  %v300 = vmul.f32 %v236, 0.2
  %v301 = vmul.f32 %v237, 0.2
  %v302 = vmul.f32 %v238, 0.2
  %v303 = vmul.f32 %v239, 0.2
  %v304 = vmul.f32 %v240, 0.2
  %v305 = vmul.f32 %v241, 0.2
  %v306 = vmul.f32 %v242, 0.2
  %v307 = vmul.f32 %v243, 0.2
  %v308 = vmul.f32 %v244, 0.2
  %v309 = vmul.f32 %v245, 0.2
  %v310 = vmul.f32 %v246, 0.2
  %v311 = vmul.f32 %v247, 0.2
  %v312 = vmul.f32 %v248, 0.2
  %v313 = vmul.f32 %v249, 0.2
  %v314 = vmul.f32 %v250, 0.2
  %v315 = vmul.f32 %v251, 0.2
  %v316 = vmul.f32 %v252, 0.2
  %v317 = vmul.f32 %v253, 0.2
  %v318 = vmul.f32 %v254, 0.2
  %v319 = vmul.f32 %v255, 0.2
  %v320 = vmul.f32 %v256, 0.2
  %v321 = vmul.f32 %v257, 0.2
  %v322 = vmul.f32 %v258, 0.2
  %v323 = vmul.f32 %v259, 0.2
  %v324 = vmul.f32 %v260, 0.2
  %v325 = vmul.f32 %v261, 0.2
  %v326 = vmul.f32 %v262, 0.2
  %v327 = vmul.f32 %v263, 0.2
  %v328 = vmul.f32 %v264, 0.2
  %v329 = vmul.f32 %v265, 0.2
  %v330 = vmul.f32 %v266, 0.2
  %v331 = vmul.f32 %v267, 0.2
  %v332 = vmul.f32 %v268, 0.2
  %v333 = vmul.f32 %v269, 0.2
  %v334 = vmul.f32 %v270, 0.2
  %v335 = vmul.f32 %v271, 0.2
  %v336 = vmul.f32 %v272, 0.2
  %v337 = vmul.f32 %v273, 0.2
  %v338 = vmul.f32 %v274, 0.2
  %v339 = vmul.f32 %v275, 0.2
  %v340 = vmul.f32 %v276, 0.2
  %v341 = vmul.f32 %v277, 0.2
  %v342 = vmul.f32 %v278, 0.2
  %v343 = vmul.f32 %v279, 0.2
  %v344 = vmul.f32 %v280, 0.2
  %v345 = vmul.f32 %v281, 0.2
  %v346 = vmul.f32 %v282, 0.2
  %v347 = vmul.f32 %v283, 0.2
  %v348 = vmul.f32 %v284, 0.2
  %v349 = vmul.f32 %v285, 0.2
  %v350 = vmax.f32 %v222, %v286
  %v351 = vmax.f32 %v223, %v287
  %v352 = vmax.f32 %v224, %v288
  %v353 = vmax.f32 %v225, %v289
  %v354 = vmax.f32 %v226, %v290
  %v355 = vmax.f32 %v227, %v291
  %v356 = vmax.f32 %v228, %v292
  %v357 = vmax.f32 %v229, %v293
  %v358 = vmax.f32 %v230, %v294
  %v359 = vmax.f32 %v231, %v295
  %v360 = vmax.f32 %v232, %v296
  %v361 = vmax.f32 %v233, %v297
  %v362 = vmax.f32 %v234, %v298
  %v363 = vmax.f32 %v235, %v299
  %v364 = vmax.f32 %v236, %v300
  %v365 = vmax.f32 %v237, %v301
  %v366 = vmax.f32 %v238, %v302
  %v367 = vmax.f32 %v239, %v303
  %v368 = vmax.f32 %v240, %v304
  %v369 = vmax.f32 %v241, %v305
  %v370 = vmax.f32 %v242, %v306
  %v371 = vmax.f32 %v243, %v307
  %v372 = vmax.f32 %v244, %v308
  %v373 = vmax.f32 %v245, %v309
  %v374 = vmax.f32 %v246, %v310
  %v375 = vmax.f32 %v247, %v311
  %v376 = vmax.f32 %v248, %v312
  %v377 = vmax.f32 %v249, %v313
  %v378 = vmax.f32 %v250, %v314
  %v379 = vmax.f32 %v251, %v315
  %v380 = vmax.f32 %v252, %v316
  %v381 = vmax.f32 %v253, %v317
  %v382 = vmax.f32 %v254, %v318
  %v383 = vmax.f32 %v255, %v319
  %v384 = vmax.f32 %v256, %v320
  %v385 = vmax.f32 %v257, %v321
  %v386 = vmax.f32 %v258, %v322
  %v387 = vmax.f32 %v259, %v323
  %v388 = vmax.f32 %v260, %v324
  %v389 = vmax.f32 %v261, %v325
  %v390 = vmax.f32 %v262, %v326
  %v391 = vmax.f32 %v263, %v327
  %v392 = vmax.f32 %v264, %v328
  %v393 = vmax.f32 %v265, %v329
  %v394 = vmax.f32 %v266, %v330
  %v395 = vmax.f32 %v267, %v331
  %v396 = vmax.f32 %v268, %v332
  %v397 = vmax.f32 %v269, %v333
  %v398 = vmax.f32 %v270, %v334
  %v399 = vmax.f32 %v271, %v335
  %v400 = vmax.f32 %v272, %v336
  %v401 = vmax.f32 %v273, %v337
  %v402 = vmax.f32 %v274, %v338
  %v403 = vmax.f32 %v275, %v339
  %v404 = vmax.f32 %v276, %v340
  %v405 = vmax.f32 %v277, %v341
  %v406 = vmax.f32 %v278, %v342
  %v407 = vmax.f32 %v279, %v343
  %v408 = vmax.f32 %v280, %v344
  %v409 = vmax.f32 %v281, %v345
  %v410 = vmax.f32 %v282, %v346
  %v411 = vmax.f32 %v283, %v347
  %v412 = vmax.f32 %v284, %v348
  %v413 = vmax.f32 %v285, %v349
  %v414 = vld [vmem:[%s0] sm:$0xff]
  %v415 = vld [vmem:[%s0 + $0x8] sm:$0xff]
  %v416 = vld [vmem:[%s0 + $0x10] sm:$0xff]
  %v417 = vld [vmem:[%s0 + $0x18] sm:$0xff]
  %v418 = vld [vmem:[%s0 + $0x20] sm:$0xff]
  %v419 = vld [vmem:[%s0 + $0x28] sm:$0xff]
  %v420 = vld [vmem:[%s0 + $0x30] sm:$0xff]
  %v421 = vld [vmem:[%s0 + $0x38] sm:$0xff]
  %v422 = vld [vmem:[%s0 + $0x40] sm:$0xff]
  %v423 = vld [vmem:[%s0 + $0x48] sm:$0xff]
  %v424 = vld [vmem:[%s0 + $0x50] sm:$0xff]
  %v425 = vld [vmem:[%s0 + $0x58] sm:$0xff]
  %v426 = vld [vmem:[%s0 + $0x60] sm:$0xff]
  %v427 = vld [vmem:[%s0 + $0x68] sm:$0xff]
  %v428 = vld [vmem:[%s0 + $0x70] sm:$0xff]
  %v429 = vld [vmem:[%s0 + $0x78] sm:$0xff]
  %v430 = vld [vmem:[%s0 + $0x80] sm:$0xff]
  %v431 = vld [vmem:[%s0 + $0x88] sm:$0xff]
  %v432 = vld [vmem:[%s0 + $0x90] sm:$0xff]
  %v433 = vld [vmem:[%s0 + $0x98] sm:$0xff]
  %v434 = vld [vmem:[%s0 + $0xa0] sm:$0xff]
  %v435 = vld [vmem:[%s0 + $0xa8] sm:$0xff]
  %v436 = vld [vmem:[%s0 + $0xb0] sm:$0xff]
  %v437 = vld [vmem:[%s0 + $0xb8] sm:$0xff]
  %v438 = vld [vmem:[%s0 + $0xc0] sm:$0xff]
  %v439 = vld [vmem:[%s0 + $0xc8] sm:$0xff]
  %v440 = vld [vmem:[%s0 + $0xd0] sm:$0xff]
  %v441 = vld [vmem:[%s0 + $0xd8] sm:$0xff]
  %v442 = vld [vmem:[%s0 + $0xe0] sm:$0xff]
  %v443 = vld [vmem:[%s0 + $0xe8] sm:$0xff]
  %v444 = vld [vmem:[%s0 + $0xf0] sm:$0xff]
  %v445 = vld [vmem:[%s0 + $0xf8] sm:$0xff]
  %v446 = vunpack.c.l.bf16 %v414
  %v447 = vunpack.c.h.bf16 %v414
  %v448 = vunpack.c.l.bf16 %v415
  %v449 = vunpack.c.h.bf16 %v415
  %v450 = vunpack.c.l.bf16 %v416
  %v451 = vunpack.c.h.bf16 %v416
  %v452 = vunpack.c.l.bf16 %v417
  %v453 = vunpack.c.h.bf16 %v417
  %v454 = vunpack.c.l.bf16 %v418
  %v455 = vunpack.c.h.bf16 %v418
  %v456 = vunpack.c.l.bf16 %v419
  %v457 = vunpack.c.h.bf16 %v419
  %v458 = vunpack.c.l.bf16 %v420
  %v459 = vunpack.c.h.bf16 %v420
  %v460 = vunpack.c.l.bf16 %v421
  %v461 = vunpack.c.h.bf16 %v421
  %v462 = vunpack.c.l.bf16 %v422
  %v463 = vunpack.c.h.bf16 %v422
  %v464 = vunpack.c.l.bf16 %v423
  %v465 = vunpack.c.h.bf16 %v423
  %v466 = vunpack.c.l.bf16 %v424
  %v467 = vunpack.c.h.bf16 %v424
  %v468 = vunpack.c.l.bf16 %v425
  %v469 = vunpack.c.h.bf16 %v425
  %v470 = vunpack.c.l.bf16 %v426
  %v471 = vunpack.c.h.bf16 %v426
  %v472 = vunpack.c.l.bf16 %v427
  %v473 = vunpack.c.h.bf16 %v427
  %v474 = vunpack.c.l.bf16 %v428
  %v475 = vunpack.c.h.bf16 %v428
  %v476 = vunpack.c.l.bf16 %v429
  %v477 = vunpack.c.h.bf16 %v429
  %v478 = vunpack.c.l.bf16 %v430
  %v479 = vunpack.c.h.bf16 %v430
  %v480 = vunpack.c.l.bf16 %v431
  %v481 = vunpack.c.h.bf16 %v431
  %v482 = vunpack.c.l.bf16 %v432
  %v483 = vunpack.c.h.bf16 %v432
  %v484 = vunpack.c.l.bf16 %v433
  %v485 = vunpack.c.h.bf16 %v433
  %v486 = vunpack.c.l.bf16 %v434
  %v487 = vunpack.c.h.bf16 %v434
  %v488 = vunpack.c.l.bf16 %v435
  %v489 = vunpack.c.h.bf16 %v435
  %v490 = vunpack.c.l.bf16 %v436
  %v491 = vunpack.c.h.bf16 %v436
  %v492 = vunpack.c.l.bf16 %v437
  %v493 = vunpack.c.h.bf16 %v437
  %v494 = vunpack.c.l.bf16 %v438
  %v495 = vunpack.c.h.bf16 %v438
  %v496 = vunpack.c.l.bf16 %v439
  %v497 = vunpack.c.h.bf16 %v439
  %v498 = vunpack.c.l.bf16 %v440
  %v499 = vunpack.c.h.bf16 %v440
  %v500 = vunpack.c.l.bf16 %v441
  %v501 = vunpack.c.h.bf16 %v441
  %v502 = vunpack.c.l.bf16 %v442
  %v503 = vunpack.c.h.bf16 %v442
  %v504 = vunpack.c.l.bf16 %v443
  %v505 = vunpack.c.h.bf16 %v443
  %v506 = vunpack.c.l.bf16 %v444
  %v507 = vunpack.c.h.bf16 %v444
  %v508 = vunpack.c.l.bf16 %v445
  %v509 = vunpack.c.h.bf16 %v445
  %v510 = vadd.f32 %v350, %v446
  %v511 = vadd.f32 %v351, %v447
  %v512 = vadd.f32 %v352, %v448
  %v513 = vadd.f32 %v353, %v449
  %v514 = vadd.f32 %v354, %v450
  %v515 = vadd.f32 %v355, %v451
  %v516 = vadd.f32 %v356, %v452
  %v517 = vadd.f32 %v357, %v453
  %v518 = vadd.f32 %v358, %v454
  %v519 = vadd.f32 %v359, %v455
  %v520 = vadd.f32 %v360, %v456
  %v521 = vadd.f32 %v361, %v457
  %v522 = vadd.f32 %v362, %v458
  %v523 = vadd.f32 %v363, %v459
  %v524 = vadd.f32 %v364, %v460
  %v525 = vadd.f32 %v365, %v461
  %v526 = vadd.f32 %v366, %v462
  %v527 = vadd.f32 %v367, %v463
  %v528 = vadd.f32 %v368, %v464
  %v529 = vadd.f32 %v369, %v465
  %v530 = vadd.f32 %v370, %v466
  %v531 = vadd.f32 %v371, %v467
  %v532 = vadd.f32 %v372, %v468
  %v533 = vadd.f32 %v373, %v469
  %v534 = vadd.f32 %v374, %v470
  %v535 = vadd.f32 %v375, %v471
  %v536 = vadd.f32 %v376, %v472
  %v537 = vadd.f32 %v377, %v473
  %v538 = vadd.f32 %v378, %v474
  %v539 = vadd.f32 %v379, %v475
  %v540 = vadd.f32 %v380, %v476
  %v541 = vadd.f32 %v381, %v477
  %v542 = vadd.f32 %v382, %v478
  %v543 = vadd.f32 %v383, %v479
  %v544 = vadd.f32 %v384, %v480
  %v545 = vadd.f32 %v385, %v481
  %v546 = vadd.f32 %v386, %v482
  %v547 = vadd.f32 %v387, %v483
  %v548 = vadd.f32 %v388, %v484
  %v549 = vadd.f32 %v389, %v485
  %v550 = vadd.f32 %v390, %v486
  %v551 = vadd.f32 %v391, %v487
  %v552 = vadd.f32 %v392, %v488
  %v553 = vadd.f32 %v393, %v489
  %v554 = vadd.f32 %v394, %v490
  %v555 = vadd.f32 %v395, %v491
  %v556 = vadd.f32 %v396, %v492
  %v557 = vadd.f32 %v397, %v493
  %v558 = vadd.f32 %v398, %v494
  %v559 = vadd.f32 %v399, %v495
  %v560 = vadd.f32 %v400, %v496
  %v561 = vadd.f32 %v401, %v497
  %v562 = vadd.f32 %v402, %v498
  %v563 = vadd.f32 %v403, %v499
  %v564 = vadd.f32 %v404, %v500
  %v565 = vadd.f32 %v405, %v501
  %v566 = vadd.f32 %v406, %v502
  %v567 = vadd.f32 %v407, %v503
  %v568 = vadd.f32 %v408, %v504
  %v569 = vadd.f32 %v409, %v505
  %v570 = vadd.f32 %v410, %v506
  %v571 = vadd.f32 %v411, %v507
  %v572 = vadd.f32 %v412, %v508
  %v573 = vadd.f32 %v413, %v509
  %v574 = vmax.f32 %v510, %v511
  %575 = vmax.xlane.f32.xlu0 %v574
  %v576 = vpop.xlane.xlu0 %575
  %v577 = vmax.f32 %v512, %v513
  %578 = vmax.xlane.f32.xlu0 %v577
  %v579 = vpop.xlane.xlu0 %578
  %v580 = vmax.f32 %v514, %v515
  %581 = vmax.xlane.f32.xlu0 %v580
  %v582 = vpop.xlane.xlu0 %581
  %v583 = vmax.f32 %v516, %v517
  %584 = vmax.xlane.f32.xlu0 %v583
  %v585 = vpop.xlane.xlu0 %584
  %v586 = vmax.f32 %v518, %v519
  %587 = vmax.xlane.f32.xlu0 %v586
  %v588 = vpop.xlane.xlu0 %587
  %v589 = vmax.f32 %v520, %v521
  %590 = vmax.xlane.f32.xlu0 %v589
  %v591 = vpop.xlane.xlu0 %590
  %v592 = vmax.f32 %v522, %v523
  %593 = vmax.xlane.f32.xlu0 %v592
  %v594 = vpop.xlane.xlu0 %593
  %v595 = vmax.f32 %v524, %v525
  %596 = vmax.xlane.f32.xlu0 %v595
  %v597 = vpop.xlane.xlu0 %596
  %v598 = vmax.f32 %v526, %v527
  %599 = vmax.xlane.f32.xlu0 %v598
  %v600 = vpop.xlane.xlu0 %599
  %v601 = vmax.f32 %v528, %v529
  %602 = vmax.xlane.f32.xlu0 %v601
  %v603 = vpop.xlane.xlu0 %602
  %v604 = vmax.f32 %v530, %v531
  %605 = vmax.xlane.f32.xlu0 %v604
  %v606 = vpop.xlane.xlu0 %605
  %v607 = vmax.f32 %v532, %v533
  %608 = vmax.xlane.f32.xlu0 %v607
  %v609 = vpop.xlane.xlu0 %608
  %v610 = vmax.f32 %v534, %v535
  %611 = vmax.xlane.f32.xlu0 %v610
  %v612 = vpop.xlane.xlu0 %611
  %v613 = vmax.f32 %v536, %v537
  %614 = vmax.xlane.f32.xlu0 %v613
  %v615 = vpop.xlane.xlu0 %614
  %v616 = vmax.f32 %v538, %v539
  %617 = vmax.xlane.f32.xlu0 %v616
  %v618 = vpop.xlane.xlu0 %617
  %v619 = vmax.f32 %v540, %v541
  %620 = vmax.xlane.f32.xlu0 %v619
  %v621 = vpop.xlane.xlu0 %620
  %v622 = vmax.f32 %v542, %v543
  %623 = vmax.xlane.f32.xlu0 %v622
  %v624 = vpop.xlane.xlu0 %623
  %v625 = vmax.f32 %v544, %v545
  %626 = vmax.xlane.f32.xlu0 %v625
  %v627 = vpop.xlane.xlu0 %626
  %v628 = vmax.f32 %v546, %v547
  %629 = vmax.xlane.f32.xlu0 %v628
  %v630 = vpop.xlane.xlu0 %629
  %v631 = vmax.f32 %v548, %v549
  %632 = vmax.xlane.f32.xlu0 %v631
  %v633 = vpop.xlane.xlu0 %632
  %v634 = vmax.f32 %v550, %v551
  %635 = vmax.xlane.f32.xlu0 %v634
  %v636 = vpop.xlane.xlu0 %635
  %v637 = vmax.f32 %v552, %v553
  %638 = vmax.xlane.f32.xlu0 %v637
  %v639 = vpop.xlane.xlu0 %638
  %v640 = vmax.f32 %v554, %v555
  %641 = vmax.xlane.f32.xlu0 %v640
  %v642 = vpop.xlane.xlu0 %641
  %v643 = vmax.f32 %v556, %v557
  %644 = vmax.xlane.f32.xlu0 %v643
  %v645 = vpop.xlane.xlu0 %644
  %v646 = vmax.f32 %v558, %v559
  %647 = vmax.xlane.f32.xlu0 %v646
  %v648 = vpop.xlane.xlu0 %647
  %v649 = vmax.f32 %v560, %v561
  %650 = vmax.xlane.f32.xlu0 %v649
  %v651 = vpop.xlane.xlu0 %650
  %v652 = vmax.f32 %v562, %v563
  %653 = vmax.xlane.f32.xlu0 %v652
  %v654 = vpop.xlane.xlu0 %653
  %v655 = vmax.f32 %v564, %v565
  %656 = vmax.xlane.f32.xlu0 %v655
  %v657 = vpop.xlane.xlu0 %656
  %v658 = vmax.f32 %v566, %v567
  %659 = vmax.xlane.f32.xlu0 %v658
  %v660 = vpop.xlane.xlu0 %659
  %v661 = vmax.f32 %v568, %v569
  %662 = vmax.xlane.f32.xlu0 %v661
  %v663 = vpop.xlane.xlu0 %662
  %v664 = vmax.f32 %v570, %v571
  %665 = vmax.xlane.f32.xlu0 %v664
  %v666 = vpop.xlane.xlu0 %665
  %v667 = vmax.f32 %v572, %v573
  %668 = vmax.xlane.f32.xlu0 %v667
  %v669 = vpop.xlane.xlu0 %668
  %v670 = vsub.f32 %v510, %v576
  %v671 = vsub.f32 %v511, %v576
  %v672 = vsub.f32 %v512, %v579
  %v673 = vsub.f32 %v513, %v579
  %v674 = vsub.f32 %v514, %v582
  %v675 = vsub.f32 %v515, %v582
  %v676 = vsub.f32 %v516, %v585
  %v677 = vsub.f32 %v517, %v585
  %v678 = vsub.f32 %v518, %v588
  %v679 = vsub.f32 %v519, %v588
  %v680 = vsub.f32 %v520, %v591
  %v681 = vsub.f32 %v521, %v591
  %v682 = vsub.f32 %v522, %v594
  %v683 = vsub.f32 %v523, %v594
  %v684 = vsub.f32 %v524, %v597
  %v685 = vsub.f32 %v525, %v597
  %v686 = vsub.f32 %v526, %v600
  %v687 = vsub.f32 %v527, %v600
  %v688 = vsub.f32 %v528, %v603
  %v689 = vsub.f32 %v529, %v603
  %v690 = vsub.f32 %v530, %v606
  %v691 = vsub.f32 %v531, %v606
  %v692 = vsub.f32 %v532, %v609
  %v693 = vsub.f32 %v533, %v609
  %v694 = vsub.f32 %v534, %v612
  %v695 = vsub.f32 %v535, %v612
  %v696 = vsub.f32 %v536, %v615
  %v697 = vsub.f32 %v537, %v615
  %v698 = vsub.f32 %v538, %v618
  %v699 = vsub.f32 %v539, %v618
  %v700 = vsub.f32 %v540, %v621
  %v701 = vsub.f32 %v541, %v621
  %v702 = vsub.f32 %v542, %v624
  %v703 = vsub.f32 %v543, %v624
  %v704 = vsub.f32 %v544, %v627
  %v705 = vsub.f32 %v545, %v627
  %v706 = vsub.f32 %v546, %v630
  %v707 = vsub.f32 %v547, %v630
  %v708 = vsub.f32 %v548, %v633
  %v709 = vsub.f32 %v549, %v633
  %v710 = vsub.f32 %v550, %v636
  %v711 = vsub.f32 %v551, %v636
  %v712 = vsub.f32 %v552, %v639
  %v713 = vsub.f32 %v553, %v639
  %v714 = vsub.f32 %v554, %v642
  %v715 = vsub.f32 %v555, %v642
  %v716 = vsub.f32 %v556, %v645
  %v717 = vsub.f32 %v557, %v645
  %v718 = vsub.f32 %v558, %v648
  %v719 = vsub.f32 %v559, %v648
  %v720 = vsub.f32 %v560, %v651
  %v721 = vsub.f32 %v561, %v651
  %v722 = vsub.f32 %v562, %v654
  %v723 = vsub.f32 %v563, %v654
  %v724 = vsub.f32 %v564, %v657
  %v725 = vsub.f32 %v565, %v657
  %v726 = vsub.f32 %v566, %v660
  %v727 = vsub.f32 %v567, %v660
  %v728 = vsub.f32 %v568, %v663
  %v729 = vsub.f32 %v569, %v663
  %v730 = vsub.f32 %v570, %v666
  %v731 = vsub.f32 %v571, %v666
  %v732 = vsub.f32 %v572, %v669
  %v733 = vsub.f32 %v573, %v669
  %v734 = vmul.f32 %v670, 1.442695
  %v735 = vpow.pop %v734
  %v736 = vmul.f32 %v671, 1.442695
  %v737 = vpow.pop %v736
  %v738 = vmul.f32 %v672, 1.442695
  %v739 = vpow.pop %v738
  %v740 = vmul.f32 %v673, 1.442695
  %v741 = vpow.pop %v740
  %v742 = vmul.f32 %v674, 1.442695
  %v743 = vpow.pop %v742
  %v744 = vmul.f32 %v675, 1.442695
  %v745 = vpow.pop %v744
  %v746 = vmul.f32 %v676, 1.442695
  %v747 = vpow.pop %v746
  %v748 = vmul.f32 %v677, 1.442695
  %v749 = vpow.pop %v748
  %v750 = vmul.f32 %v678, 1.442695
  %v751 = vpow.pop %v750
  %v752 = vmul.f32 %v679, 1.442695
  %v753 = vpow.pop %v752
  %v754 = vmul.f32 %v680, 1.442695
  %v755 = vpow.pop %v754
  %v756 = vmul.f32 %v681, 1.442695
  %v757 = vpow.pop %v756
  %v758 = vmul.f32 %v682, 1.442695
  %v759 = vpow.pop %v758
  %v760 = vmul.f32 %v683, 1.442695
  %v761 = vpow.pop %v760
  %v762 = vmul.f32 %v684, 1.442695
  %v763 = vpow.pop %v762
  %v764 = vmul.f32 %v685, 1.442695
  %v765 = vpow.pop %v764
  %v766 = vmul.f32 %v686, 1.442695
  %v767 = vpow.pop %v766
  %v768 = vmul.f32 %v687, 1.442695
  %v769 = vpow.pop %v768
  %v770 = vmul.f32 %v688, 1.442695
  %v771 = vpow.pop %v770
  %v772 = vmul.f32 %v689, 1.442695
  %v773 = vpow.pop %v772
  %v774 = vmul.f32 %v690, 1.442695
  %v775 = vpow.pop %v774
  %v776 = vmul.f32 %v691, 1.442695
  %v777 = vpow.pop %v776
  %v778 = vmul.f32 %v692, 1.442695
  %v779 = vpow.pop %v778
  %v780 = vmul.f32 %v693, 1.442695
  %v781 = vpow.pop %v780
  %v782 = vmul.f32 %v694, 1.442695
  %v783 = vpow.pop %v782
  %v784 = vmul.f32 %v695, 1.442695
  %v785 = vpow.pop %v784
  %v786 = vmul.f32 %v696, 1.442695
  %v787 = vpow.pop %v786
  %v788 = vmul.f32 %v697, 1.442695
  %v789 = vpow.pop %v788
  %v790 = vmul.f32 %v698, 1.442695
  %v791 = vpow.pop %v790
  %v792 = vmul.f32 %v699, 1.442695
  %v793 = vpow.pop %v792
  %v794 = vmul.f32 %v700, 1.442695
  %v795 = vpow.pop %v794
  %v796 = vmul.f32 %v701, 1.442695
  %v797 = vpow.pop %v796
  %v798 = vmul.f32 %v702, 1.442695
  %v799 = vpow.pop %v798
  %v800 = vmul.f32 %v703, 1.442695
  %v801 = vpow.pop %v800
  %v802 = vmul.f32 %v704, 1.442695
  %v803 = vpow.pop %v802
  %v804 = vmul.f32 %v705, 1.442695
  %v805 = vpow.pop %v804
  %v806 = vmul.f32 %v706, 1.442695
  %v807 = vpow.pop %v806
  %v808 = vmul.f32 %v707, 1.442695
  %v809 = vpow.pop %v808
  %v810 = vmul.f32 %v708, 1.442695
  %v811 = vpow.pop %v810
  %v812 = vmul.f32 %v709, 1.442695
  %v813 = vpow.pop %v812
  %v814 = vmul.f32 %v710, 1.442695
  %v815 = vpow.pop %v814
  %v816 = vmul.f32 %v711, 1.442695
  %v817 = vpow.pop %v816
  %v818 = vmul.f32 %v712, 1.442695
  %v819 = vpow.pop %v818
  %v820 = vmul.f32 %v713, 1.442695
  %v821 = vpow.pop %v820
  %v822 = vmul.f32 %v714, 1.442695
  %v823 = vpow.pop %v822
  %v824 = vmul.f32 %v715, 1.442695
  %v825 = vpow.pop %v824
  %v826 = vmul.f32 %v716, 1.442695
  %v827 = vpow.pop %v826
  %v828 = vmul.f32 %v717, 1.442695
  %v829 = vpow.pop %v828
  %v830 = vmul.f32 %v718, 1.442695
  %v831 = vpow.pop %v830
  %v832 = vmul.f32 %v719, 1.442695
  %v833 = vpow.pop %v832
  %v834 = vmul.f32 %v720, 1.442695
  %v835 = vpow.pop %v834
  %v836 = vmul.f32 %v721, 1.442695
  %v837 = vpow.pop %v836
  %v838 = vmul.f32 %v722, 1.442695
  %v839 = vpow.pop %v838
  %v840 = vmul.f32 %v723, 1.442695
  %v841 = vpow.pop %v840
  %v842 = vmul.f32 %v724, 1.442695
  %v843 = vpow.pop %v842
  %v844 = vmul.f32 %v725, 1.442695
  %v845 = vpow.pop %v844
  %v846 = vmul.f32 %v726, 1.442695
  %v847 = vpow.pop %v846
  %v848 = vmul.f32 %v727, 1.442695
  %v849 = vpow.pop %v848
  %v850 = vmul.f32 %v728, 1.442695
  %v851 = vpow.pop %v850
  %v852 = vmul.f32 %v729, 1.442695
  %v853 = vpow.pop %v852
  %v854 = vmul.f32 %v730, 1.442695
  %v855 = vpow.pop %v854
  %v856 = vmul.f32 %v731, 1.442695
  %v857 = vpow.pop %v856
  %v858 = vmul.f32 %v732, 1.442695
  %v859 = vpow.pop %v858
  %v860 = vmul.f32 %v733, 1.442695
  %v861 = vpow.pop %v860
  %v862 = vadd.f32 %v735, %v737
  %863 = vadd.xlane.f32.xlu0 %v862
  %v864 = vpop.xlane.xlu0 %863
  %v865 = vadd.f32 %v739, %v741
  %866 = vadd.xlane.f32.xlu0 %v865
  %v867 = vpop.xlane.xlu0 %866
  %v868 = vadd.f32 %v743, %v745
  %869 = vadd.xlane.f32.xlu0 %v868
  %v870 = vpop.xlane.xlu0 %869
  %v871 = vadd.f32 %v747, %v749
  %872 = vadd.xlane.f32.xlu0 %v871
  %v873 = vpop.xlane.xlu0 %872
  %v874 = vadd.f32 %v751, %v753
  %875 = vadd.xlane.f32.xlu0 %v874
  %v876 = vpop.xlane.xlu0 %875
  %v877 = vadd.f32 %v755, %v757
  %878 = vadd.xlane.f32.xlu0 %v877
  %v879 = vpop.xlane.xlu0 %878
  %v880 = vadd.f32 %v759, %v761
  %881 = vadd.xlane.f32.xlu0 %v880
  %v882 = vpop.xlane.xlu0 %881
  %v883 = vadd.f32 %v763, %v765
  %884 = vadd.xlane.f32.xlu0 %v883
  %v885 = vpop.xlane.xlu0 %884
  %v886 = vadd.f32 %v767, %v769
  %887 = vadd.xlane.f32.xlu0 %v886
  %v888 = vpop.xlane.xlu0 %887
  %v889 = vadd.f32 %v771, %v773
  %890 = vadd.xlane.f32.xlu0 %v889
  %v891 = vpop.xlane.xlu0 %890
  %v892 = vadd.f32 %v775, %v777
  %893 = vadd.xlane.f32.xlu0 %v892
  %v894 = vpop.xlane.xlu0 %893
  %v895 = vadd.f32 %v779, %v781
  %896 = vadd.xlane.f32.xlu0 %v895
  %v897 = vpop.xlane.xlu0 %896
  %v898 = vadd.f32 %v783, %v785
  %899 = vadd.xlane.f32.xlu0 %v898
  %v900 = vpop.xlane.xlu0 %899
  %v901 = vadd.f32 %v787, %v789
  %902 = vadd.xlane.f32.xlu0 %v901
  %v903 = vpop.xlane.xlu0 %902
  %v904 = vadd.f32 %v791, %v793
  %905 = vadd.xlane.f32.xlu0 %v904
  %v906 = vpop.xlane.xlu0 %905
  %v907 = vadd.f32 %v795, %v797
  %908 = vadd.xlane.f32.xlu0 %v907
  %v909 = vpop.xlane.xlu0 %908
  %v910 = vadd.f32 %v799, %v801
  %911 = vadd.xlane.f32.xlu0 %v910
  %v912 = vpop.xlane.xlu0 %911
  %v913 = vadd.f32 %v803, %v805
  %914 = vadd.xlane.f32.xlu0 %v913
  %v915 = vpop.xlane.xlu0 %914
  %v916 = vadd.f32 %v807, %v809
  %917 = vadd.xlane.f32.xlu0 %v916
  %v918 = vpop.xlane.xlu0 %917
  %v919 = vadd.f32 %v811, %v813
  %920 = vadd.xlane.f32.xlu0 %v919
  %v921 = vpop.xlane.xlu0 %920
  %v922 = vadd.f32 %v815, %v817
  %923 = vadd.xlane.f32.xlu0 %v922
  %v924 = vpop.xlane.xlu0 %923
  %v925 = vadd.f32 %v819, %v821
  %926 = vadd.xlane.f32.xlu0 %v925
  %v927 = vpop.xlane.xlu0 %926
  %v928 = vadd.f32 %v823, %v825
  %929 = vadd.xlane.f32.xlu0 %v928
  %v930 = vpop.xlane.xlu0 %929
  %v931 = vadd.f32 %v827, %v829
  %932 = vadd.xlane.f32.xlu0 %v931
  %v933 = vpop.xlane.xlu0 %932
  %v934 = vadd.f32 %v831, %v833
  %935 = vadd.xlane.f32.xlu0 %v934
  %v936 = vpop.xlane.xlu0 %935
  %v937 = vadd.f32 %v835, %v837
  %938 = vadd.xlane.f32.xlu0 %v937
  %v939 = vpop.xlane.xlu0 %938
  %v940 = vadd.f32 %v839, %v841
  %941 = vadd.xlane.f32.xlu0 %v940
  %v942 = vpop.xlane.xlu0 %941
  %v943 = vadd.f32 %v843, %v845
  %944 = vadd.xlane.f32.xlu0 %v943
  %v945 = vpop.xlane.xlu0 %944
  %v946 = vadd.f32 %v847, %v849
  %947 = vadd.xlane.f32.xlu0 %v946
  %v948 = vpop.xlane.xlu0 %947
  %v949 = vadd.f32 %v851, %v853
  %950 = vadd.xlane.f32.xlu0 %v949
  %v951 = vpop.xlane.xlu0 %950
  %v952 = vadd.f32 %v855, %v857
  %953 = vadd.xlane.f32.xlu0 %v952
  %v954 = vpop.xlane.xlu0 %953
  %v955 = vadd.f32 %v859, %v861
  %956 = vadd.xlane.f32.xlu0 %v955
  %v957 = vpop.xlane.xlu0 %956
  %v958 = vrcp.pop %v864
  %v959 = vrcp.pop %v867
  %v960 = vrcp.pop %v870
  %v961 = vrcp.pop %v873
  %v962 = vrcp.pop %v876
  %v963 = vrcp.pop %v879
  %v964 = vrcp.pop %v882
  %v965 = vrcp.pop %v885
  %v966 = vrcp.pop %v888
  %v967 = vrcp.pop %v891
  %v968 = vrcp.pop %v894
  %v969 = vrcp.pop %v897
  %v970 = vrcp.pop %v900
  %v971 = vrcp.pop %v903
  %v972 = vrcp.pop %v906
  %v973 = vrcp.pop %v909
  %v974 = vrcp.pop %v912
  %v975 = vrcp.pop %v915
  %v976 = vrcp.pop %v918
  %v977 = vrcp.pop %v921
  %v978 = vrcp.pop %v924
  %v979 = vrcp.pop %v927
  %v980 = vrcp.pop %v930
  %v981 = vrcp.pop %v933
  %v982 = vrcp.pop %v936
  %v983 = vrcp.pop %v939
  %v984 = vrcp.pop %v942
  %v985 = vrcp.pop %v945
  %v986 = vrcp.pop %v948
  %v987 = vrcp.pop %v951
  %v988 = vrcp.pop %v954
  %v989 = vrcp.pop %v957
  %v990 = vpack.c.bf16 %v739, %v735
  %v991 = vpack.c.bf16 %v741, %v737
  %v992 = vpack.c.bf16 %v747, %v743
  %v993 = vpack.c.bf16 %v749, %v745
  %v994 = vpack.c.bf16 %v755, %v751
  %v995 = vpack.c.bf16 %v757, %v753
  %v996 = vpack.c.bf16 %v763, %v759
  %v997 = vpack.c.bf16 %v765, %v761
  %v998 = vpack.c.bf16 %v771, %v767
  %v999 = vpack.c.bf16 %v773, %v769
  %v1000 = vpack.c.bf16 %v779, %v775
  %v1001 = vpack.c.bf16 %v781, %v777
  %v1002 = vpack.c.bf16 %v787, %v783
  %v1003 = vpack.c.bf16 %v789, %v785
  %v1004 = vpack.c.bf16 %v795, %v791
  %v1005 = vpack.c.bf16 %v797, %v793
  %v1006 = vpack.c.bf16 %v803, %v799
  %v1007 = vpack.c.bf16 %v805, %v801
  %v1008 = vpack.c.bf16 %v811, %v807
  %v1009 = vpack.c.bf16 %v813, %v809
  %v1010 = vpack.c.bf16 %v819, %v815
  %v1011 = vpack.c.bf16 %v821, %v817
  %v1012 = vpack.c.bf16 %v827, %v823
  %v1013 = vpack.c.bf16 %v829, %v825
  %v1014 = vpack.c.bf16 %v835, %v831
  %v1015 = vpack.c.bf16 %v837, %v833
  %v1016 = vpack.c.bf16 %v843, %v839
  %v1017 = vpack.c.bf16 %v845, %v841
  %v1018 = vpack.c.bf16 %v851, %v847
  %v1019 = vpack.c.bf16 %v853, %v849
  %v1020 = vpack.c.bf16 %v859, %v855
  %v1021 = vpack.c.bf16 %v861, %v857
  %v1022 = vld [vmem:[%s1] sm:$0xf]
  %v1023 = vld [vmem:[%s1 + $0x4] sm:$0xf]
  %v1024 = vld [vmem:[%s1 + $0x8] sm:$0xf]
  %v1025 = vld [vmem:[%s1 + $0xc] sm:$0xf]
  %v1026 = vld [vmem:[%s1 + $0x10] sm:$0xf]
  %v1027 = vld [vmem:[%s1 + $0x14] sm:$0xf]
  %v1028 = vld [vmem:[%s1 + $0x18] sm:$0xf]
  %v1029 = vld [vmem:[%s1 + $0x1c] sm:$0xf]
  %v1030 = vld [vmem:[%s1 + $0x20] sm:$0xf]
  %v1031 = vld [vmem:[%s1 + $0x24] sm:$0xf]
  %v1032 = vld [vmem:[%s1 + $0x28] sm:$0xf]
  %v1033 = vld [vmem:[%s1 + $0x2c] sm:$0xf]
  %v1034 = vld [vmem:[%s1 + $0x30] sm:$0xf]
  %v1035 = vld [vmem:[%s1 + $0x34] sm:$0xf]
  %v1036 = vld [vmem:[%s1 + $0x38] sm:$0xf]
  %v1037 = vld [vmem:[%s1 + $0x3c] sm:$0xf]
  %v1038 = vld [vmem:[%s1 + $0x40] sm:$0xf]
  %v1039 = vld [vmem:[%s1 + $0x44] sm:$0xf]
  %v1040 = vld [vmem:[%s1 + $0x48] sm:$0xf]
  %v1041 = vld [vmem:[%s1 + $0x4c] sm:$0xf]
  %v1042 = vld [vmem:[%s1 + $0x50] sm:$0xf]
  %v1043 = vld [vmem:[%s1 + $0x54] sm:$0xf]
  %v1044 = vld [vmem:[%s1 + $0x58] sm:$0xf]
  %v1045 = vld [vmem:[%s1 + $0x5c] sm:$0xf]
  %v1046 = vld [vmem:[%s1 + $0x60] sm:$0xf]
  %v1047 = vld [vmem:[%s1 + $0x64] sm:$0xf]
  %v1048 = vld [vmem:[%s1 + $0x68] sm:$0xf]
  %v1049 = vld [vmem:[%s1 + $0x6c] sm:$0xf]
  %v1050 = vld [vmem:[%s1 + $0x70] sm:$0xf]
  %v1051 = vld [vmem:[%s1 + $0x74] sm:$0xf]
  %v1052 = vld [vmem:[%s1 + $0x78] sm:$0xf]
  %v1053 = vld [vmem:[%s1 + $0x7c] sm:$0xf]
  %v1086 = vunpack.c.l.b16 %v1022
  %v1087 = vunpack.c.l.b16 %v1023
  %v1088 = vunpack.c.l.b16 %v1024
  %v1089 = vunpack.c.l.b16 %v1025
  %v1090 = vunpack.c.l.b16 %v1026
  %v1091 = vunpack.c.l.b16 %v1027
  %v1092 = vunpack.c.l.b16 %v1028
  %v1093 = vunpack.c.l.b16 %v1029
  %v1094 = vunpack.c.l.b16 %v1030
  %v1095 = vunpack.c.l.b16 %v1031
  %v1096 = vunpack.c.l.b16 %v1032
  %v1097 = vunpack.c.l.b16 %v1033
  %v1098 = vunpack.c.l.b16 %v1034
  %v1099 = vunpack.c.l.b16 %v1035
  %v1100 = vunpack.c.l.b16 %v1036
  %v1101 = vunpack.c.l.b16 %v1037
  %v1102 = vunpack.c.l.b16 %v1038
  %v1103 = vunpack.c.l.b16 %v1039
  %v1104 = vunpack.c.l.b16 %v1040
  %v1105 = vunpack.c.l.b16 %v1041
  %v1106 = vunpack.c.l.b16 %v1042
  %v1107 = vunpack.c.l.b16 %v1043
  %v1108 = vunpack.c.l.b16 %v1044
  %v1109 = vunpack.c.l.b16 %v1045
  %v1110 = vunpack.c.l.b16 %v1046
  %v1111 = vunpack.c.l.b16 %v1047
  %v1112 = vunpack.c.l.b16 %v1048
  %v1113 = vunpack.c.l.b16 %v1049
  %v1114 = vunpack.c.l.b16 %v1050
  %v1115 = vunpack.c.l.b16 %v1051
  %v1116 = vunpack.c.l.b16 %v1052
  %v1117 = vunpack.c.l.b16 %v1053
  %v1118 = vpack.c.b16 %v1087, %v1086
  %v1119 = vpack.c.b16 %v1089, %v1088
  %v1120 = vpack.c.b16 %v1091, %v1090
  %v1121 = vpack.c.b16 %v1093, %v1092
  %v1122 = vpack.c.b16 %v1095, %v1094
  %v1123 = vpack.c.b16 %v1097, %v1096
  %v1124 = vpack.c.b16 %v1099, %v1098
  %v1125 = vpack.c.b16 %v1101, %v1100
  %v1126 = vpack.c.b16 %v1103, %v1102
  %v1127 = vpack.c.b16 %v1105, %v1104
  %v1128 = vpack.c.b16 %v1107, %v1106
  %v1129 = vpack.c.b16 %v1109, %v1108
  %v1130 = vpack.c.b16 %v1111, %v1110
  %v1131 = vpack.c.b16 %v1113, %v1112
  %v1132 = vpack.c.b16 %v1115, %v1114
  %v1133 = vpack.c.b16 %v1117, %v1116
  %1150 = vmatprep.subr.bf16.mxu0 0
  %1151 = vmatpush1.bf16.msra.mxu0 %v1125
  %1152 = vmatprep.subr.bf16.mxu0 0
  %1153 = vmatpush1.bf16.msra.mxu0 %v1124
  %1154 = vmatprep.subr.bf16.mxu0 0
  %1155 = vmatpush1.bf16.msra.mxu0 %v1123
  %1156 = vmatprep.subr.bf16.mxu0 0
  %1157 = vmatpush1.bf16.msra.mxu0 %v1122
  %1158 = vmatprep.subr.bf16.mxu0 0
  %1159 = vmatpush1.bf16.msra.mxu0 %v1121
  %1160 = vmatprep.subr.bf16.mxu0 0
  %1161 = vmatpush1.bf16.msra.mxu0 %v1120
  %1162 = vmatprep.subr.bf16.mxu0 0
  %1163 = vmatpush1.bf16.msra.mxu0 %v1119
  %1164 = vmatprep.subr.bf16.mxu0 0
  %1165 = vmatpush1.bf16.msra.mxu0 %v1118
  %1166 = vmatprep.subr.bf16.mxu0 0
  %1167 = vmatpush2.bf16.msra.mxu0 %v1133
  %1168 = vmatprep.subr.bf16.mxu0 0
  %1169 = vmatpush2.bf16.msra.mxu0 %v1132
  %1170 = vmatprep.subr.bf16.mxu0 0
  %1171 = vmatpush2.bf16.msra.mxu0 %v1131
  %1172 = vmatprep.subr.bf16.mxu0 0
  %1173 = vmatpush2.bf16.msra.mxu0 %v1130
  %1174 = vmatprep.subr.bf16.mxu0 0
  %1175 = vmatpush2.bf16.msra.mxu0 %v1129
  %1176 = vmatprep.subr.bf16.mxu0 0
  %1177 = vmatpush2.bf16.msra.mxu0 %v1128
  %1178 = vmatprep.subr.bf16.mxu0 0
  %1179 = vmatpush2.bf16.msra.mxu0 %v1127
  %1180 = vmatprep.subr.bf16.mxu0 0
  %1181 = vmatpush2.bf16.msra.mxu0 %v1126
  %1182 = vmatprep.mubr.bf16.mxu0 %v991
  %1183 = vmatmul.mubr.bf16.gmra.mxu0 %v990
  %v1184 = vpop.f32.mrf.mxu0
  %v1185 = vadd.f32 0.0, %v1184
  %v1186 = vpop.f32.mrf.mxu0
  %v1187 = vpop.f32.mrf.mxu0
  %v1188 = vadd.f32 0.0, %v1187
  %v1189 = vpop.f32.mrf.mxu0
  %1190 = vmatprep.mubr.bf16.mxu0 %v993
  %1191 = vmatmul.mubr.bf16.gmra.mxu0 %v992
  %v1192 = vpop.f32.mrf.mxu0
  %v1193 = vadd.f32 0.0, %v1192
  %v1194 = vpop.f32.mrf.mxu0
  %v1195 = vpop.f32.mrf.mxu0
  %v1196 = vadd.f32 0.0, %v1195
  %v1197 = vpop.f32.mrf.mxu0
  %1198 = vmatprep.mubr.bf16.mxu0 %v995
  %1199 = vmatmul.mubr.bf16.gmra.mxu0 %v994
  %v1200 = vpop.f32.mrf.mxu0
  %v1201 = vadd.f32 0.0, %v1200
  %v1202 = vpop.f32.mrf.mxu0
  %v1203 = vpop.f32.mrf.mxu0
  %v1204 = vadd.f32 0.0, %v1203
  %v1205 = vpop.f32.mrf.mxu0
  %1206 = vmatprep.mubr.bf16.mxu0 %v997
  %1207 = vmatmul.mubr.bf16.gmra.mxu0 %v996
  %v1208 = vpop.f32.mrf.mxu0
  %v1209 = vadd.f32 0.0, %v1208
  %v1210 = vpop.f32.mrf.mxu0
  %v1211 = vpop.f32.mrf.mxu0
  %v1212 = vadd.f32 0.0, %v1211
  %v1213 = vpop.f32.mrf.mxu0
  %1214 = vmatprep.mubr.bf16.mxu0 %v999
  %1215 = vmatmul.mubr.bf16.gmra.mxu0 %v998
  %v1216 = vpop.f32.mrf.mxu0
  %v1217 = vadd.f32 0.0, %v1216
  %v1218 = vpop.f32.mrf.mxu0
  %v1219 = vpop.f32.mrf.mxu0
  %v1220 = vadd.f32 0.0, %v1219
  %v1221 = vpop.f32.mrf.mxu0
  %1222 = vmatprep.mubr.bf16.mxu0 %v1001
  %1223 = vmatmul.mubr.bf16.gmra.mxu0 %v1000
  %v1224 = vpop.f32.mrf.mxu0
  %v1225 = vadd.f32 0.0, %v1224
  %v1226 = vpop.f32.mrf.mxu0
  %v1227 = vpop.f32.mrf.mxu0
  %v1228 = vadd.f32 0.0, %v1227
  %v1229 = vpop.f32.mrf.mxu0
  %1230 = vmatprep.mubr.bf16.mxu0 %v1003
  %1231 = vmatmul.mubr.bf16.gmra.mxu0 %v1002
  %v1232 = vpop.f32.mrf.mxu0
  %v1233 = vadd.f32 0.0, %v1232
  %v1234 = vpop.f32.mrf.mxu0
  %v1235 = vpop.f32.mrf.mxu0
  %v1236 = vadd.f32 0.0, %v1235
  %v1237 = vpop.f32.mrf.mxu0
  %1238 = vmatprep.mubr.bf16.mxu0 %v1005
  %1239 = vmatmul.mubr.bf16.gmra.mxu0 %v1004
  %v1240 = vpop.f32.mrf.mxu0
  %v1241 = vadd.f32 0.0, %v1240
  %v1242 = vpop.f32.mrf.mxu0
  %v1243 = vpop.f32.mrf.mxu0
  %v1244 = vadd.f32 0.0, %v1243
  %v1245 = vpop.f32.mrf.mxu0
  %1246 = vmatprep.mubr.bf16.mxu0 %v1007
  %1247 = vmatmul.mubr.bf16.gmra.mxu0 %v1006
  %v1248 = vpop.f32.mrf.mxu0
  %v1249 = vadd.f32 0.0, %v1248
  %v1250 = vpop.f32.mrf.mxu0
  %v1251 = vpop.f32.mrf.mxu0
  %v1252 = vadd.f32 0.0, %v1251
  %v1253 = vpop.f32.mrf.mxu0
  %1254 = vmatprep.mubr.bf16.mxu0 %v1009
  %1255 = vmatmul.mubr.bf16.gmra.mxu0 %v1008
  %v1256 = vpop.f32.mrf.mxu0
  %v1257 = vadd.f32 0.0, %v1256
  %v1258 = vpop.f32.mrf.mxu0
  %v1259 = vpop.f32.mrf.mxu0
  %v1260 = vadd.f32 0.0, %v1259
  %v1261 = vpop.f32.mrf.mxu0
  %1262 = vmatprep.mubr.bf16.mxu0 %v1011
  %1263 = vmatmul.mubr.bf16.gmra.mxu0 %v1010
  %v1264 = vpop.f32.mrf.mxu0
  %v1265 = vadd.f32 0.0, %v1264
  %v1266 = vpop.f32.mrf.mxu0
  %v1267 = vpop.f32.mrf.mxu0
  %v1268 = vadd.f32 0.0, %v1267
  %v1269 = vpop.f32.mrf.mxu0
  %1270 = vmatprep.mubr.bf16.mxu0 %v1013
  %1271 = vmatmul.mubr.bf16.gmra.mxu0 %v1012
  %v1272 = vpop.f32.mrf.mxu0
  %v1273 = vadd.f32 0.0, %v1272
  %v1274 = vpop.f32.mrf.mxu0
  %v1275 = vpop.f32.mrf.mxu0
  %v1276 = vadd.f32 0.0, %v1275
  %v1277 = vpop.f32.mrf.mxu0
  %1278 = vmatprep.mubr.bf16.mxu0 %v1015
  %1279 = vmatmul.mubr.bf16.gmra.mxu0 %v1014
  %v1280 = vpop.f32.mrf.mxu0
  %v1281 = vadd.f32 0.0, %v1280
  %v1282 = vpop.f32.mrf.mxu0
  %v1283 = vpop.f32.mrf.mxu0
  %v1284 = vadd.f32 0.0, %v1283
  %v1285 = vpop.f32.mrf.mxu0
  %1286 = vmatprep.mubr.bf16.mxu0 %v1017
  %1287 = vmatmul.mubr.bf16.gmra.mxu0 %v1016
  %v1288 = vpop.f32.mrf.mxu0
  %v1289 = vadd.f32 0.0, %v1288
  %v1290 = vpop.f32.mrf.mxu0
  %v1291 = vpop.f32.mrf.mxu0
  %v1292 = vadd.f32 0.0, %v1291
  %v1293 = vpop.f32.mrf.mxu0
  %1294 = vmatprep.mubr.bf16.mxu0 %v1019
  %1295 = vmatmul.mubr.bf16.gmra.mxu0 %v1018
  %v1296 = vpop.f32.mrf.mxu0
  %v1297 = vadd.f32 0.0, %v1296
  %v1298 = vpop.f32.mrf.mxu0
  %v1299 = vpop.f32.mrf.mxu0
  %v1300 = vadd.f32 0.0, %v1299
  %v1301 = vpop.f32.mrf.mxu0
  %1302 = vmatprep.mubr.bf16.mxu0 %v1021
  %1303 = vmatmul.mubr.bf16.gmra.mxu0 %v1020
  %v1304 = vpop.f32.mrf.mxu0
  %v1305 = vadd.f32 0.0, %v1304
  %v1306 = vpop.f32.mrf.mxu0
  %v1307 = vpop.f32.mrf.mxu0
  %v1308 = vadd.f32 0.0, %v1307
  %v1309 = vpop.f32.mrf.mxu0
  %1310 = vdwg.mxu0
  %v1311 = vmul.f32 %v1185, %v958
  %v1312 = vmul.f32 %v1188, %v959
  %v1313 = vmul.f32 %v1193, %v960
  %v1314 = vmul.f32 %v1196, %v961
  %v1315 = vmul.f32 %v1201, %v962
  %v1316 = vmul.f32 %v1204, %v963
  %v1317 = vmul.f32 %v1209, %v964
  %v1318 = vmul.f32 %v1212, %v965
  %v1319 = vmul.f32 %v1217, %v966
  %v1320 = vmul.f32 %v1220, %v967
  %v1321 = vmul.f32 %v1225, %v968
  %v1322 = vmul.f32 %v1228, %v969
  %v1323 = vmul.f32 %v1233, %v970
  %v1324 = vmul.f32 %v1236, %v971
  %v1325 = vmul.f32 %v1241, %v972
  %v1326 = vmul.f32 %v1244, %v973
  %v1327 = vmul.f32 %v1249, %v974
  %v1328 = vmul.f32 %v1252, %v975
  %v1329 = vmul.f32 %v1257, %v976
  %v1330 = vmul.f32 %v1260, %v977
  %v1331 = vmul.f32 %v1265, %v978
  %v1332 = vmul.f32 %v1268, %v979
  %v1333 = vmul.f32 %v1273, %v980
  %v1334 = vmul.f32 %v1276, %v981
  %v1335 = vmul.f32 %v1281, %v982
  %v1336 = vmul.f32 %v1284, %v983
  %v1337 = vmul.f32 %v1289, %v984
  %v1338 = vmul.f32 %v1292, %v985
  %v1339 = vmul.f32 %v1297, %v986
  %v1340 = vmul.f32 %v1300, %v987
  %v1341 = vmul.f32 %v1305, %v988
  %v1342 = vmul.f32 %v1308, %v989
  %1343 = vst [vmem:[%s4] sm:$0xff] %v1311
  %1344 = vst [vmem:[%s4 + $0x8] sm:$0xff] %v1312
  %1345 = vst [vmem:[%s4 + $0x10] sm:$0xff] %v1313
  %1346 = vst [vmem:[%s4 + $0x18] sm:$0xff] %v1314
  %1347 = vst [vmem:[%s4 + $0x20] sm:$0xff] %v1315
  %1348 = vst [vmem:[%s4 + $0x28] sm:$0xff] %v1316
  %1349 = vst [vmem:[%s4 + $0x30] sm:$0xff] %v1317
  %1350 = vst [vmem:[%s4 + $0x38] sm:$0xff] %v1318
  %1351 = vst [vmem:[%s4 + $0x40] sm:$0xff] %v1319
  %1352 = vst [vmem:[%s4 + $0x48] sm:$0xff] %v1320
  %1353 = vst [vmem:[%s4 + $0x50] sm:$0xff] %v1321
  %1354 = vst [vmem:[%s4 + $0x58] sm:$0xff] %v1322
  %1355 = vst [vmem:[%s4 + $0x60] sm:$0xff] %v1323
  %1356 = vst [vmem:[%s4 + $0x68] sm:$0xff] %v1324
  %1357 = vst [vmem:[%s4 + $0x70] sm:$0xff] %v1325
  %1358 = vst [vmem:[%s4 + $0x78] sm:$0xff] %v1326
  %1359 = vst [vmem:[%s4 + $0x80] sm:$0xff] %v1327
  %1360 = vst [vmem:[%s4 + $0x88] sm:$0xff] %v1328
  %1361 = vst [vmem:[%s4 + $0x90] sm:$0xff] %v1329
  %1362 = vst [vmem:[%s4 + $0x98] sm:$0xff] %v1330
  %1363 = vst [vmem:[%s4 + $0xa0] sm:$0xff] %v1331
  %1364 = vst [vmem:[%s4 + $0xa8] sm:$0xff] %v1332
  %1365 = vst [vmem:[%s4 + $0xb0] sm:$0xff] %v1333
  %1366 = vst [vmem:[%s4 + $0xb8] sm:$0xff] %v1334
  %1367 = vst [vmem:[%s4 + $0xc0] sm:$0xff] %v1335
  %1368 = vst [vmem:[%s4 + $0xc8] sm:$0xff] %v1336
  %1369 = vst [vmem:[%s4 + $0xd0] sm:$0xff] %v1337
  %1370 = vst [vmem:[%s4 + $0xd8] sm:$0xff] %v1338
  %1371 = vst [vmem:[%s4 + $0xe0] sm:$0xff] %v1339
  %1372 = vst [vmem:[%s4 + $0xe8] sm:$0xff] %v1340
  %1373 = vst [vmem:[%s4 + $0xf0] sm:$0xff] %v1341
  %1374 = vst [vmem:[%s4 + $0xf8] sm:$0xff] %v1342
  // Predicated region
  $region18: #{gat_forward.1} parent=0 // pred_check
    _
  $region19: #{gat_forward.1} parent=0 // pred_check_branch
    %1376 = sbr.rel (0) target = $region21
  $region20: #{gat_forward.1} parent=0 // pred_region
    _
  $region21: #{gat_forward.1} parent=0 // pred_fallthru
    _
  // Predicated region
  $region22: #{gat_forward.1} parent=0 // pred_check
    _
  $region23: #{gat_forward.1} parent=0 // pred_check_branch
    %1378 = sbr.rel (0) target = $region25
  $region24: #{gat_forward.1} parent=0 // pred_region
    _
  $region25: #{gat_forward.1} parent=0 // pred_fallthru
    _

</llo_original>
